<compile_context>
chip_gen: v7x
topology: tpu7x:2x2x1
jax: 0.10.0
libtpu: 0.0.40
codegen_flags: <defaults>
</compile_context>

<pallas_src>
import functools
import math

import jax
import jax.numpy as jnp
from jax.experimental import pallas as pl
from jax.experimental.pallas import tpu as pltpu


# --------------------------------------------------------------------------- #
# Kernels
# --------------------------------------------------------------------------- #
def _celu_abs(x, alpha, inv_alpha):
    """|celu(x, alpha)| in f32 (exp lowers to the EUP slot)."""
    neg = alpha * (jnp.exp(x * inv_alpha) - 1.0)
    return jnp.abs(jnp.where(x > 0, x, neg))


def _celu_stats_kernel(x_ref, cand_ref, *, alpha, inv_alpha, valid_rows, block_rows):
    """Streaming stats pass: per-group maxima of |celu(x)| (approx-top-k partials).

    Each grid step reduces a (block_rows, LANES) input tile to an (8, LANES) tile of
    maxima over disjoint groups of block_rows//8 rows.  Rows past `valid_rows`
    (ragged final block) are masked to 0 so they can never enter the top-k.
    """
    i = pl.program_id(0)
    x = x_ref[...].astype(jnp.float32)
    a = _celu_abs(x, alpha, inv_alpha)
    row = jax.lax.broadcasted_iota(jnp.int32, a.shape, 0) + i * block_rows
    a = jnp.where(row < valid_rows, a, 0.0)
    m = a[0:8, :]
    for g in range(1, block_rows // 8):            # static, sublane-aligned slices
        m = jnp.maximum(m, a[g * 8:(g + 1) * 8, :])
    cand_ref[...] = m


def _celu_quant_kernel(x_ref, scale_ref, o_ref, *, alpha, inv_alpha, min_int, max_int):
    """Fused celu -> fake-quant (round/clamp) -> dequant, lane-dense full-lane stores."""
    x = x_ref[...].astype(jnp.float32)
    neg = alpha * (jnp.exp(x * inv_alpha) - 1.0)
    y = jnp.where(x > 0, x, neg)
    s = scale_ref[0]                               # per-tensor scale (SMEM scalar)
    q = jnp.clip(jnp.round(y / s), float(min_int), float(max_int))
    o_ref[...] = (q * s).astype(o_ref.dtype)


# --------------------------------------------------------------------------- #
# Wrapper
# --------------------------------------------------------------------------- #
def _pick_block_rows(rows, sub, cap):
    """Block row count: multiple of `sub`, <= rows, <= cap, aiming for >= 2 grid steps."""
    if rows < sub:
        return rows                                # full-dim block, single grid step
    half = (rows // 2) // sub * sub
    return min(cap, max(sub, half))


def quant_celu(x, bits: int, alpha: float = 1.0, *, donate_input: bool = False):
    """Fake-quantized celu(x, alpha): per-tensor signed int-b quant of torch.celu(x)."""
    orig_shape = x.shape
    orig_dtype = x.dtype
    total = int(x.size)
    alpha_f = float(alpha)
    inv_alpha = 1.0 / alpha_f
    max_int = 2 ** (bits - 1) - 1
    min_int = -(2 ** (bits - 1))
    sub = {4: 8, 2: 16, 1: 32}.get(x.dtype.itemsize, 8)   # sublane quantum of input dtype

    # ---- lane-dense (rows, LANES) slab; zero-copy reshape, no pad on the common path ----
    lanes = None
    for ln in (512, 256, 128):
        if total % ln == 0 and total // ln >= sub:
            lanes = ln
            break
    if lanes is None:
        for ln in (512, 256, 128):
            if total % ln == 0:
                lanes = ln
                break
    padded = False
    if lanes is not None:
        rows = total // lanes
        x2d = x.reshape(rows, lanes)               # zero-copy bitcast, no pad / no slice
    else:
        # TODO(synk): replace this rare pad+slice fallback (total % 128 != 0) with a
        #             masked-tail kernel to avoid the two extra full HBM passes.
        lanes = 128
        rows = -(-total // lanes)
        flat = jnp.pad(x.reshape(-1), (0, rows * lanes - total))
        x2d = flat.reshape(rows, lanes)
        padded = True

    vparams = dict(dimension_semantics=("parallel",),       # v7x: shard rows over both TCs
                   vmem_limit_bytes=32 * 1024 * 1024)

    # ---- pass 1: streaming percentile partials (fused |celu|, no sort, ~1 read pass) ----
    if rows >= sub:
        trs = _pick_block_rows(rows, sub, 512)
        grid_s = pl.cdiv(rows, trs)
        cand = pl.pallas_call(
            functools.partial(_celu_stats_kernel, alpha=alpha_f, inv_alpha=inv_alpha,
                              valid_rows=rows, block_rows=trs),
            out_shape=jax.ShapeDtypeStruct((grid_s * 8, lanes), jnp.float32),
            grid=(grid_s,),
            in_specs=[pl.BlockSpec((trs, lanes), lambda i: (i, 0))],
            out_specs=pl.BlockSpec((8, lanes), lambda i: (i, 0)),
            compiler_params=pltpu.CompilerParams(**vparams),
        )(x2d)
        cand_flat = cand.reshape(-1)
    else:
        # tiny tensor (< 8 rows): direct XLA, a few KiB at most
        cand_flat = _celu_abs(x2d.astype(jnp.float32), alpha_f, inv_alpha).reshape(-1)

    # brevitas AbsPercentile: kthvalue with k = floor(0.01 * 99.999 * N + 0.5)
    k_bottom = max(1, min(total, int(math.floor(0.99999 * total + 0.5))))
    k_top = total - k_bottom + 1                   # rank from the top (== 1 for N <= 50k)
    if k_top <= 1:
        stat = jnp.max(cand_flat)                  # exact brevitas percentile (== abs-max)
    else:
        k_eff = int(min(k_top, cand_flat.shape[0]))
        stat = jax.lax.top_k(cand_flat, k_eff)[0][-1]   # smallest of the top-k partials
    scale = jnp.maximum(stat, 1e-8) / float(2 ** (bits - 1))
    scale_arr = jnp.reshape(scale, (1,)).astype(jnp.float32)

    # ---- pass 2: fused celu + quant + dequant (read + write pass) ----
    tr = _pick_block_rows(rows, sub, 1024)         # up to 2 MiB f32 tiles, grid >= 2 when possible
    grid_q = pl.cdiv(rows, tr)
    out2d = pl.pallas_call(
        functools.partial(_celu_quant_kernel, alpha=alpha_f, inv_alpha=inv_alpha,
                          min_int=min_int, max_int=max_int),
        out_shape=jax.ShapeDtypeStruct((rows, lanes), orig_dtype),
        grid=(grid_q,),
        in_specs=[pl.BlockSpec((tr, lanes), lambda i: (i, 0)),        # pipelined row tiles
                  pl.BlockSpec(memory_space=pltpu.MemorySpace.SMEM)], # scale scalar
        out_specs=pl.BlockSpec((tr, lanes), lambda i: (i, 0)),
        compiler_params=pltpu.CompilerParams(**vparams),
        input_output_aliases=({0: 0} if donate_input else {}),
    )(x2d, scale_arr)

    if padded:
        return out2d.reshape(-1)[:total].reshape(orig_shape)
    return out2d.reshape(orig_shape)


# --------------------------------------------------------------------------- #
# Self-test
# --------------------------------------------------------------------------- #
if __name__ == "__main__":
    key = jax.random.PRNGKey(0)
    x = jax.random.normal(key, (2, 4, 16, 16), dtype=jnp.float32) * 5.0   # NCHW

    bits = 4
    alpha = 1.0
    out = jax.block_until_ready(quant_celu(x, bits, alpha))

    # pure-JAX reference with brevitas kthvalue-style percentile
    xf = x.astype(jnp.float32)
    y = jnp.where(xf > 0, xf, alpha * (jnp.exp(xf / alpha) - 1.0))
    yabs = jnp.abs(y).reshape(-1)
    n = int(yabs.shape[0])
    k_bottom = max(1, min(n, int(math.floor(0.99999 * n + 0.5))))
    stat = jnp.sort(yabs)[k_bottom - 1]            # exact kthvalue (== max for this size)
    scale = jnp.maximum(stat, 1e-8) / float(2 ** (bits - 1))
    q = jnp.clip(jnp.round(y / scale), -(2 ** (bits - 1)), 2 ** (bits - 1) - 1)
    ref = (q * scale).astype(x.dtype)

    diff = jnp.abs(out - ref)
    assert out.shape == x.shape and out.dtype == x.dtype
    # exact match expected; tolerate at-most-one-quant-step differences on rare
    # round-boundary elements from kernel vs XLA exp lowering
    assert float(jnp.max(diff)) <= float(scale) * 1.001 + 1e-5, "mismatch vs reference"
    assert float(jnp.mean((diff > 1e-5).astype(jnp.float32))) < 0.01, "too many mismatches"

    print("KERNEL_OK")
</pallas_src>

<mosaic_0001>
module attributes {stable_mosaic.version = 11 : i64} {
  func.func @_celu_stats_kernel(%arg0: i32, %arg1: memref<8x256xf32, #tpu.memory_space<vmem>>, %arg2: memref<8x256xf32, #tpu.memory_space<vmem>>) attributes {dimension_semantics = [#tpu.dimension_semantics<parallel>], iteration_bounds = array<i64: 1>, scalar_prefetch = 0 : i64, scratch_operands = 0 : i64, tpu.core_type = #tpu.core_type<tc>, window_params = [{transform_indices = @transform_0, window_bounds = array<i64: 8, 256>}, {transform_indices = @transform_1, window_bounds = array<i64: 8, 256>}]} {
    %c0 = arith.constant 0 : index
    %c0_0 = arith.constant 0 : index
    %0 = vector.load %arg1[%c0, %c0_0] : memref<8x256xf32, #tpu.memory_space<vmem>>, vector<8x256xf32>
    %cst = arith.constant 1.000000e+00 : f32
    %1 = vector.broadcast %cst : f32 to vector<8x256xf32>
    %2 = arith.mulf %0, %1 : vector<8x256xf32>
    %3 = math.exp %2 : vector<8x256xf32>
    %cst_1 = arith.constant 1.000000e+00 : f32
    %4 = vector.broadcast %cst_1 : f32 to vector<8x256xf32>
    %5 = arith.subf %3, %4 : vector<8x256xf32>
    %cst_2 = arith.constant 1.000000e+00 : f32
    %6 = vector.broadcast %cst_2 : f32 to vector<8x256xf32>
    %7 = arith.mulf %6, %5 : vector<8x256xf32>
    %cst_3 = arith.constant 0.000000e+00 : f32
    %8 = vector.broadcast %cst_3 : f32 to vector<8x256xf32>
    %9 = arith.cmpf ogt, %0, %8 : vector<8x256xf32>
    %10 = arith.select %9, %0, %7 : vector<8x256xi1>, vector<8x256xf32>
    %11 = math.absf %10 : vector<8x256xf32>
    %12 = tpu.iota {dimensions = array<i32: 0>} : vector<8x256xi32>
    %c8_i32 = arith.constant 8 : i32
    %13 = arith.muli %arg0, %c8_i32 : i32
    %14 = vector.broadcast %13 : i32 to vector<8x256xi32>
    %15 = arith.addi %12, %14 : vector<8x256xi32>
    %c8_i32_4 = arith.constant 8 : i32
    %16 = vector.broadcast %c8_i32_4 : i32 to vector<8x256xi32>
    %17 = arith.cmpi slt, %15, %16 : vector<8x256xi32>
    %cst_5 = arith.constant 0.000000e+00 : f32
    %18 = vector.broadcast %cst_5 : f32 to vector<8x256xf32>
    %19 = arith.select %17, %11, %18 : vector<8x256xi1>, vector<8x256xf32>
    %c0_6 = arith.constant 0 : index
    %c0_7 = arith.constant 0 : index
    %20 = vector.load %arg2[%c0_6, %c0_7] : memref<8x256xf32, #tpu.memory_space<vmem>>, vector<8x256xf32>
    tpu.vector_store %arg2[%c0_6, %c0_7], %19 {strides = array<i32>} : memref<8x256xf32, #tpu.memory_space<vmem>>, vector<8x256xf32>,
    return
  }
  func.func @transform_0(%arg0: i32) -> (i32, i32) {
    %c0_i32 = arith.constant 0 : i32
    %c0_i32_0 = arith.constant 0 : i32
    return %arg0, %c0_i32 : i32, i32
  }
  func.func @transform_1(%arg0: i32) -> (i32, i32) {
    %c0_i32 = arith.constant 0 : i32
    %c0_i32_0 = arith.constant 0 : i32
    return %arg0, %c0_i32 : i32, i32
  }
}

</mosaic_0001>

<llo_original>
// kernel: tpu_custom_call.1
$region0: #{tpu_custom_call.1}
  #allocation0 [shape = 'u32[]', space=smem, size = 0x4, offset = 0x4, fixed_abs, tag = 'smem constant byte address 0x4 - core index']
  #allocation1 [shape = 'u32[144,128]{1,0:T(1,128)}', space=vmem, size = 0x12000, scoped, tag = 'internal scratch']
  %s0 = inlined_call_operand.hbm [shape: f32[8,256], index: 0, kind: input, shape index: {}]
  %s1 = inlined_call_operand.hbm [shape: f32[8,256], index: 1, kind: output, shape index: {}]
  %s2 = sld [smem:[#allocation0]]
  $region18: #{tpu_custom_call.1} parent=0
    _
  %s4 = ssub.s32 1, %s2
  %s5 = scalar_select 0, %s4, %s2
  $region1: #{tpu_custom_call.1} parent=0
    #allocation2 [shape = 'u8[8192]{0}', space=vmem, size = 0x2000, scoped, tag = 'input window, operand 0, single buffered']
    #allocation3 [shape = 's32[1]{0}', space=sflag, size = 0x4, scoped, tag = 'scoped memory for tpu_custom_call.1']
    #allocation4 [shape = 's32[1]{0}', space=sflag, size = 0x4, scoped, tag = 'scoped memory for tpu_custom_call.1']
    #allocation5 [shape = 'u8[8192]{0}', space=vmem, size = 0x2000, scoped, tag = 'output window, operand 0, single buffered']
    %6 = vsyncpa [#allocation3], 0
    %7 = vsyncpa [#allocation4], 0
    // Predicated region
    $region2: #{tpu_custom_call.1} parent=1 // pred_check
      _
    $region3: #{tpu_custom_call.1} parent=1 // pred_check_branch
      %9 = sbr.rel (0) target = $region5
    $region4: #{tpu_custom_call.1} parent=1 // pred_region
      %s11 = ssub.s32 256, 256
      %12 = vsyncadd [#allocation3], %s11
      %s14 = sshll.u32 [#allocation2], 4
      %s15 = int_to_ptr.vmem [resolvable:$true] %s14
      %17 = dma.hbm_to_vmem [thread:$0]  %s0, 256, %s15, [#allocation3]
    $region5: #{tpu_custom_call.1} parent=1 // pred_fallthru
      _
    // Predicated region
    $region6: #{tpu_custom_call.1} parent=1 // pred_check
      _
    $region7: #{tpu_custom_call.1} parent=1 // pred_check_branch
      %19 = sbr.rel (0) target = $region9
    $region8: #{tpu_custom_call.1} parent=1 // pred_region
      %20 = dma.done [#allocation3], 256
    $region9: #{tpu_custom_call.1} parent=1 // pred_fallthru
      _
    %v21 = vld [vmem:[#allocation2] sm:$0xff]
    %v22 = vld [vmem:[#allocation2 + $0x8] sm:$0xff]
    %v23 = vmul.f32 %v21, 1.442695
    %v24 = vpow.pop %v23
    %v25 = vmul.f32 %v22, 1.442695
    %v26 = vpow.pop %v25
    %v27 = vsub.f32 %v24, 1.0
    %v28 = vsub.f32 %v26, 1.0
    %vm29 = vcmp.gt.f32.partialorder %v21, 0.0
    %vm30 = vcmp.gt.f32.partialorder %v22, 0.0
    %v31 = vsel %vm29, %v21, %v27
    %v32 = vsel %vm30, %v22, %v28
    %v33 = vand.u32 2147483647, %v31
    %v34 = vand.u32 2147483647, %v32
    %v35 = vlaneseq
    %v36 = vshrl.u32 %v35, 7
    %s37 = smul.u32 0, 8
    %v38 = vstv %s37
    %v39 = vadd.s32 %v36, %v38
    %vm40 = vcmp.lt.s32.totalorder %v39, 8
    %v41 = vsel %vm40, %v33, 0.0
    %v42 = vsel %vm40, %v34, 0.0
    %43 = vst [vmem:[#allocation5] sm:$0xff] %v41
    %44 = vst [vmem:[#allocation5 + $0x8] sm:$0xff] %v42
    // Predicated region
    $region10: #{tpu_custom_call.1} parent=1 // pred_check
      _
    $region11: #{tpu_custom_call.1} parent=1 // pred_check_branch
      %46 = sbr.rel (0) target = $region13
    $region12: #{tpu_custom_call.1} parent=1 // pred_region
      %s48 = ssub.s32 256, 256
      %49 = vsyncadd [#allocation4], %s48
      %s51 = sshll.u32 [#allocation5], 4
      %s52 = int_to_ptr.vmem [resolvable:$true] %s51
      %54 = dma.vmem_to_hbm [thread:$0]  %s52, 256, %s1, [#allocation4]
    $region13: #{tpu_custom_call.1} parent=1 // pred_fallthru
      _
    // Predicated region
    $region14: #{tpu_custom_call.1} parent=1 // pred_check
      _
    $region15: #{tpu_custom_call.1} parent=1 // pred_check_branch
      %56 = sbr.rel (0) target = $region17
    $region16: #{tpu_custom_call.1} parent=1 // pred_region
      %57 = dma.done [#allocation4], 256
    $region17: #{tpu_custom_call.1} parent=1 // pred_fallthru
      _
    %58 = vsyncpa [#allocation3], 1
    %59 = vsyncpa [#allocation4], 1

</llo_original>
